<compile_context>
chip_gen: v7x
topology: tpu7x:2x2x1
jax: 0.10.0
libtpu: 0.0.40
codegen_flags: <defaults>
</compile_context>

<pallas_src>
import jax
import jax.numpy as jnp
import numpy as np
from jax.experimental import pallas as pl
from jax.experimental.pallas import tpu as pltpu


def _stem_kernel(p_ref, w_ref, b_ref, o_ref):
    # p_ref: (K=27, TM) bf16 patches (K-major, lane-dense over output pixels)
    # w_ref: (C_out, K) f32 BN-scale-folded weights (resident)
    # b_ref: (C_out, 1) f32 folded BN bias (resident)
    # o_ref: (C_out, TM) f32 output tile (lane-dense over pixels)
    p = p_ref[...].astype(jnp.float32)                       # widen activation stream
    y = jnp.dot(w_ref[...], p, preferred_element_type=jnp.float32)
    o_ref[...] = jnp.maximum(y + b_ref[...], 0.0)            # folded-BN bias + ReLU


def stem_forward(x_nchw, weight, gamma, beta, running_mean, running_var,
                 eps=1e-5):
    N, C_in, H, W = x_nchw.shape
    C_out, wc_in, kH, kW = weight.shape
    assert wc_in == C_in and kH == 3 and kW == 3
    H_out = (H + 2 - 3) // 2 + 1
    W_out = (W + 2 - 3) // 2 + 1
    M = H_out * W_out
    K = C_in * kH * kW                                       # 27

    # ---- wrapper: K-major im2col (pure layout plumbing, fused by XLA) -------
    # patches[n, ci*9 + kh*3 + kw, h*W_out + w] = xpad[n, ci, 2h+kh, 2w+kw]
    xpad = jnp.pad(x_nchw.astype(jnp.bfloat16), ((0, 0), (0, 0), (1, 1), (1, 1)))
    cols = [xpad[:, :, kh:kh + 2 * H_out - 1:2, kw:kw + 2 * W_out - 1:2]
            for kh in range(kH) for kw in range(kW)]         # each (N, C_in, H_out, W_out)
    patches = jnp.stack(cols, axis=2).reshape(N, K, M)       # bf16, minor dim = M (dense)

    # Fold BatchNorm (eval mode) into the conv weights / a per-channel bias.
    # TODO(synk): training-mode BatchNorm (batch statistics) is not computed.
    scale = (gamma / jnp.sqrt(running_var + eps)).astype(jnp.float32)
    w_t = weight.astype(jnp.float32).reshape(C_out, K) * scale[:, None]   # (C_out, K)
    bias = (beta - running_mean * scale).astype(jnp.float32).reshape(C_out, 1)

    TM = min(M, 8192)                                        # multiple of 128 whenever TM < M
    grid = (N, pl.cdiv(M, TM))

    out = pl.pallas_call(
        _stem_kernel,
        out_shape=jax.ShapeDtypeStruct((N, C_out, M), jnp.float32),
        grid_spec=pltpu.PrefetchScalarGridSpec(
            num_scalar_prefetch=0,
            grid=grid,
            in_specs=[
                pl.BlockSpec((None, K, TM), lambda n, j: (n, 0, j)),   # patch tile
                pl.BlockSpec((C_out, K), lambda n, j: (0, 0)),         # resident weights
                pl.BlockSpec((C_out, 1), lambda n, j: (0, 0)),         # resident bias
            ],
            out_specs=pl.BlockSpec((None, C_out, TM), lambda n, j: (n, 0, j)),
        ),
        compiler_params=pltpu.CompilerParams(
            dimension_semantics=("parallel", "parallel")),
    )(patches, w_t, bias)

    # Contiguous logical reshape back to NCHW.
    return out.reshape(N, C_out, H_out, W_out)


def _reference(x_nchw, weight, gamma, beta, running_mean, running_var, eps=1e-5):
    y = jax.lax.conv_general_dilated(
        x_nchw.astype(jnp.float32), weight.astype(jnp.float32),
        window_strides=(2, 2), padding=((1, 1), (1, 1)),
        dimension_numbers=("NCHW", "OIHW", "NCHW"),
        precision=jax.lax.Precision.HIGHEST)
    scale = gamma / jnp.sqrt(running_var + eps)
    bias = beta - running_mean * scale
    y = y * scale[None, :, None, None] + bias[None, :, None, None]
    return jnp.maximum(y, 0.0)


if __name__ == "__main__":
    ratio = 1.0
    C_out = int(32 * ratio)
    N, C_in, H, W = 2, 3, 16, 16

    key = jax.random.PRNGKey(0)
    k_x, k_w, k_g, k_b, k_m, k_v = jax.random.split(key, 6)

    x = jax.random.normal(k_x, (N, C_in, H, W), dtype=jnp.float32)
    weight = jax.random.normal(k_w, (C_out, C_in, 3, 3), dtype=jnp.float32) * 0.1
    gamma = 1.0 + 0.1 * jax.random.normal(k_g, (C_out,), dtype=jnp.float32)
    beta = 0.1 * jax.random.normal(k_b, (C_out,), dtype=jnp.float32)
    running_mean = 0.1 * jax.random.normal(k_m, (C_out,), dtype=jnp.float32)
    running_var = jax.random.uniform(k_v, (C_out,), minval=0.5, maxval=1.5,
                                     dtype=jnp.float32)

    stem_fn = jax.jit(stem_forward)
    out = jax.block_until_ready(
        stem_fn(x, weight, gamma, beta, running_mean, running_var))
    ref = jax.block_until_ready(
        _reference(x, weight, gamma, beta, running_mean, running_var))

    assert out.shape == (N, C_out, (H + 1) // 2, (W + 1) // 2), out.shape
    # Kernel carries the activation stream in bf16 -> slightly loose tolerance.
    np.testing.assert_allclose(np.asarray(out), np.asarray(ref),
                               rtol=3e-2, atol=3e-2)
    print("KERNEL_OK")
</pallas_src>

<mosaic_0001>
module attributes {stable_mosaic.version = 11 : i64} {
  func.func @_stem_kernel(%arg0: i32, %arg1: i32, %arg2: memref<1x27x64xbf16, #tpu.memory_space<vmem>>, %arg3: memref<32x27xf32, #tpu.memory_space<vmem>>, %arg4: memref<32x1xf32, #tpu.memory_space<vmem>>, %arg5: memref<1x32x64xf32, #tpu.memory_space<vmem>>) attributes {dimension_semantics = [#tpu.dimension_semantics<parallel>, #tpu.dimension_semantics<parallel>], iteration_bounds = array<i64: 2, 1>, scalar_prefetch = 0 : i64, scratch_operands = 0 : i64, tpu.core_type = #tpu.core_type<tc>, window_params = [{transform_indices = @transform_0, window_bounds = array<i64: 1, 27, 64>}, {pipeline_mode = #tpu.pipeline_mode<synchronous>, transform_indices = @transform_1, window_bounds = array<i64: 32, 27>}, {pipeline_mode = #tpu.pipeline_mode<synchronous>, transform_indices = @transform_2, window_bounds = array<i64: 32, 1>}, {transform_indices = @transform_3, window_bounds = array<i64: 1, 32, 64>}]} {
    %c0 = arith.constant 0 : index
    %c0_0 = arith.constant 0 : index
    %c0_1 = arith.constant 0 : index
    %0 = vector.load %arg2[%c0, %c0_0, %c0_1] : memref<1x27x64xbf16, #tpu.memory_space<vmem>>, vector<1x27x64xbf16>
    %1 = vector.shape_cast %0 : vector<1x27x64xbf16> to vector<27x64xbf16>
    %2 = arith.extf %1 : vector<27x64xbf16> to vector<27x64xf32>
    %c0_2 = arith.constant 0 : index
    %c0_3 = arith.constant 0 : index
    %3 = vector.load %arg3[%c0_2, %c0_3] : memref<32x27xf32, #tpu.memory_space<vmem>>, vector<32x27xf32>
    %cst = arith.constant dense<0.000000e+00> : vector<32x64xf32>
    %4 = tpu.matmul %3, %2, %cst {dimension_numbers = #tpu.dot_dimension_numbers<[1], [0], [0], [1], [0, 0, 1, 1], [], []>} : vector<32x27xf32>, vector<27x64xf32>, vector<32x64xf32> -> vector<32x64xf32>
    %c0_4 = arith.constant 0 : index
    %c0_5 = arith.constant 0 : index
    %5 = vector.load %arg4[%c0_4, %c0_5] : memref<32x1xf32, #tpu.memory_space<vmem>>, vector<32x1xf32>
    %6 = vector.broadcast %5 : vector<32x1xf32> to vector<32x64xf32>
    %7 = arith.addf %4, %6 : vector<32x64xf32>
    %cst_6 = arith.constant 0.000000e+00 : f32
    %8 = vector.broadcast %cst_6 : f32 to vector<32x64xf32>
    %9 = arith.maximumf %7, %8 : vector<32x64xf32>
    %c0_7 = arith.constant 0 : index
    %c0_8 = arith.constant 0 : index
    %c0_9 = arith.constant 0 : index
    %10 = vector.load %arg5[%c0_7, %c0_8, %c0_9] : memref<1x32x64xf32, #tpu.memory_space<vmem>>, vector<1x32x64xf32>
    %11 = vector.shape_cast %10 : vector<1x32x64xf32> to vector<32x64xf32>
    %12 = vector.shape_cast %9 : vector<32x64xf32> to vector<1x32x64xf32>
    tpu.vector_store %arg5[%c0_7, %c0_8, %c0_9], %12 {strides = array<i32>} : memref<1x32x64xf32, #tpu.memory_space<vmem>>, vector<1x32x64xf32>,
    return
  }
  func.func @transform_0(%arg0: i32, %arg1: i32) -> (i32, i32, i32) {
    %c0_i32 = arith.constant 0 : i32
    %c0_i32_0 = arith.constant 0 : i32
    return %arg0, %c0_i32, %arg1 : i32, i32, i32
  }
  func.func @transform_1(%arg0: i32, %arg1: i32) -> (i32, i32) {
    %c0_i32 = arith.constant 0 : i32
    %c0_i32_0 = arith.constant 0 : i32
    %c0_i32_1 = arith.constant 0 : i32
    return %c0_i32, %c0_i32_0 : i32, i32
  }
  func.func @transform_2(%arg0: i32, %arg1: i32) -> (i32, i32) {
    %c0_i32 = arith.constant 0 : i32
    %c0_i32_0 = arith.constant 0 : i32
    %c0_i32_1 = arith.constant 0 : i32
    return %c0_i32, %c0_i32_0 : i32, i32
  }
  func.func @transform_3(%arg0: i32, %arg1: i32) -> (i32, i32, i32) {
    %c0_i32 = arith.constant 0 : i32
    %c0_i32_0 = arith.constant 0 : i32
    return %arg0, %c0_i32, %arg1 : i32, i32, i32
  }
}

</mosaic_0001>

<llo_original>
// kernel: stem_forward.1
$region0: #{stem_forward.1}
  #allocation0 [shape = 'u32[]', space=smem, size = 0x4, offset = 0x4, fixed_abs, tag = 'smem constant byte address 0x4 - core index']
  #allocation1 [shape = 'u32[144,128]{1,0:T(1,128)}', space=vmem, size = 0x12000, scoped, tag = 'internal scratch']
  %s0 = inlined_call_operand.vmem [shape: bf16[2,27,64], index: 0, kind: input, shape index: {}]
  %s1 = inlined_call_operand.vmem [shape: f32[32,27], index: 1, kind: input, shape index: {}]
  %s2 = inlined_call_operand.vmem [shape: f32[32,1], index: 2, kind: input, shape index: {}]
  %s3 = inlined_call_operand.vmem [shape: f32[2,32,64], index: 3, kind: output, shape index: {}]
  %s4 = sld [smem:[#allocation0]]
  $region45: #{stem_forward.1} parent=0
    _
  %s6 = ssub.s32 1, %s4
  %s7 = scalar_select 0, %s6, %s4
  loop: start=0, step=1, limit=4
  $region2: #{stem_forward.1} parent=0 // loop_pre_header
    _
  $region3: #{stem_forward.1} parent=0 // loop_header
    %s9 = sphi 0, %s13
    %p10 = scmp.ge.s32.totalorder %s9, 4
    %s16 = sphi 0, %s28
    %s17 = sphi 0, %s24
    %s18 = sphi 0, %s16
    %s19 = sphi 0, %s17
    %s20 = sphi 0, %s18
    %s21 = sphi 0, %s19
    %s33 = sphi 0, %s35
    %s36 = sphi 0, %s33
    %s37 = sphi 0, %s36
    %s53 = sphi 0, %s37
    %s57 = sphi 0, %s57
    %s59 = sphi 0, %s57
    %s60 = sphi 0, %s59
    %s74 = sphi 0, %s60
    %s78 = sphi 0, %s78
    %s80 = sphi 0, %s78
    %s81 = sphi 0, %s80
    %s95 = sphi 0, %s81
    %s103 = sphi 0, %s105
    %s106 = sphi 0, %s103
    %s107 = sphi 0, %s106
    %s123 = sphi 0, %s107
  $region4: #{stem_forward.1} parent=0 // loop_header_branch
    %12 = sbr.rel (%p10) target = $region8
  $region5: #{stem_forward.1} parent=0 // loop_body
    %s14 = ssub.s32 %s9, 1
    %s15 = ssub.s32 %s9, 2
    %s22 = sadd.s32 1, %s17
    %p23 = scmp.ge.s32.totalorder %s22, 1
    %s24 = scalar_select %p23, 0, %s22
    %s25 = sadd.s32 1, %s16
    %s26 = scalar_select %p23, %s25, %s16
    %p27 = scmp.ge.s32.totalorder %s26, 2
    %s28 = scalar_select %p27, 0, %s26
    %s29 = ssub.s32 %s16, %s28
    %s30 = ssub.s32 %s17, %s24
    %s31 = sor.u32 %s29, %s30
    %p32 = scmp.eq.s32.totalorder %s31, 0
    %s34 = sadd.s32 %s33, 1
    %s35 = scalar_select %p32, %s33, %s34
    %p38 = pneg %p32
    %p39 = scmp.eq.s32.totalorder %s9, 1
    %p40 = por %p38, %p39
    %p41 = scmp.ne.s32.totalorder %s33, %s36
    %p42 = scmp.eq.s32.totalorder %s9, 0
    %p43 = por %p41, %p42
    %p44 = scmp.ne.s32.totalorder %s33, %s36
    %p45 = scmp.eq.s32.totalorder %s14, 1
    %p46 = por %p44, %p45
    %p47 = scmp.ne.s32.totalorder %s36, %s37
    %p48 = scmp.eq.s32.totalorder %s14, 0
    %p49 = por %p47, %p48
    %p50 = scmp.ne.s32.totalorder %s36, %s37
    %p51 = scmp.eq.s32.totalorder %s15, 1
    %p52 = por %p50, %p51
    %p54 = scmp.ne.s32.totalorder %s37, %s53
    %p55 = scmp.eq.s32.totalorder %s15, 0
    %p56 = por %p54, %p55
    %s58 = sadd.s32 %s57, 1
    %p61 = scmp.eq.s32.totalorder %s9, 1
    %p62 = scmp.ne.s32.totalorder %s57, %s59
    %p63 = scmp.eq.s32.totalorder %s9, 0
    %p64 = por %p62, %p63
    %p65 = scmp.ne.s32.totalorder %s57, %s59
    %p66 = scmp.eq.s32.totalorder %s14, 1
    %p67 = por %p65, %p66
    %p68 = scmp.ne.s32.totalorder %s59, %s60
    %p69 = scmp.eq.s32.totalorder %s14, 0
    %p70 = por %p68, %p69
    %p71 = scmp.ne.s32.totalorder %s59, %s60
    %p72 = scmp.eq.s32.totalorder %s15, 1
    %p73 = por %p71, %p72
    %p75 = scmp.ne.s32.totalorder %s60, %s74
    %p76 = scmp.eq.s32.totalorder %s15, 0
    %p77 = por %p75, %p76
    %s79 = sadd.s32 %s78, 1
    %p82 = scmp.eq.s32.totalorder %s9, 1
    %p83 = scmp.ne.s32.totalorder %s78, %s80
    %p84 = scmp.eq.s32.totalorder %s9, 0
    %p85 = por %p83, %p84
    %p86 = scmp.ne.s32.totalorder %s78, %s80
    %p87 = scmp.eq.s32.totalorder %s14, 1
    %p88 = por %p86, %p87
    %p89 = scmp.ne.s32.totalorder %s80, %s81
    %p90 = scmp.eq.s32.totalorder %s14, 0
    %p91 = por %p89, %p90
    %p92 = scmp.ne.s32.totalorder %s80, %s81
    %p93 = scmp.eq.s32.totalorder %s15, 1
    %p94 = por %p92, %p93
    %p96 = scmp.ne.s32.totalorder %s81, %s95
    %p97 = scmp.eq.s32.totalorder %s15, 0
    %p98 = por %p96, %p97
    %s99 = ssub.s32 %s16, %s28
    %s100 = ssub.s32 %s17, %s24
    %s101 = sor.u32 %s99, %s100
    %p102 = scmp.eq.s32.totalorder %s101, 0
    %s104 = sadd.s32 %s103, 1
    %s105 = scalar_select %p102, %s103, %s104
    %p108 = pneg %p102
    %p109 = scmp.eq.s32.totalorder %s9, 1
    %p110 = por %p108, %p109
    %p111 = scmp.ne.s32.totalorder %s103, %s106
    %p112 = scmp.eq.s32.totalorder %s9, 0
    %p113 = por %p111, %p112
    %p114 = scmp.ne.s32.totalorder %s103, %s106
    %p115 = scmp.eq.s32.totalorder %s14, 1
    %p116 = por %p114, %p115
    %p117 = scmp.ne.s32.totalorder %s106, %s107
    %p118 = scmp.eq.s32.totalorder %s14, 0
    %p119 = por %p117, %p118
    %p120 = scmp.ne.s32.totalorder %s106, %s107
    %p121 = scmp.eq.s32.totalorder %s15, 1
    %p122 = por %p120, %p121
    %p124 = scmp.ne.s32.totalorder %s107, %s123
    %p125 = scmp.eq.s32.totalorder %s15, 0
    %p126 = por %p124, %p125
    %p127 = scmp.le.s32.totalorder 1, %s9
    %p128 = scmp.lt.s32.totalorder %s9, 3
    %p129 = pnand %p127, %p128
    %p130 = pneg %p129
    // Predicated region
    $region9: #{stem_forward.1} parent=5 // pred_check
      _
    $region10: #{stem_forward.1} parent=5 // pred_check_branch
      %132 = sbr.rel (%p129) target = $region12
    $region11: #{stem_forward.1} parent=5 // pred_region
      %s133 = ssub.s32 %s9, 1
      // Predicated region
      $region13: #{stem_forward.1} parent=11 // pred_check
        %p134 = pneg %p70
      $region14: #{stem_forward.1} parent=11 // pred_check_branch
        %136 = sbr.rel (%p134) target = $region16
      $region15: #{stem_forward.1} parent=11 // pred_region
        _
      $region16: #{stem_forward.1} parent=11 // pred_fallthru
        _
      // Predicated region
      $region17: #{stem_forward.1} parent=11 // pred_check
        %p137 = pneg %p91
      $region18: #{stem_forward.1} parent=11 // pred_check_branch
        %139 = sbr.rel (%p137) target = $region20
      $region19: #{stem_forward.1} parent=11 // pred_region
        _
      $region20: #{stem_forward.1} parent=11 // pred_fallthru
        _
    $region12: #{stem_forward.1} parent=5 // pred_fallthru
      _
    %p140 = scmp.lt.s32.totalorder %s9, 2
    // Predicated region
    $region21: #{stem_forward.1} parent=5 // pred_check
      %p141 = pneg %p140
    $region22: #{stem_forward.1} parent=5 // pred_check_branch
      %143 = sbr.rel (%p141) target = $region24
    $region23: #{stem_forward.1} parent=5 // pred_region
      // Predicated region
      $region25: #{stem_forward.1} parent=23 // pred_check
        %p144 = pneg %p43
      $region26: #{stem_forward.1} parent=23 // pred_check_branch
        %146 = sbr.rel (%p144) target = $region28
      $region27: #{stem_forward.1} parent=23 // pred_region
        %p147 = scmp.lt.s32.totalorder %s16, 1
        %s148 = scalar_select %p147, %s16, 1
        %p149 = scmp.lt.s32.totalorder %s17, 0
        %s150 = scalar_select %p149, %s17, 0
        %s151 = smul.addr %s148, 4
        %s152 = sadd.s32 %s150, %s151
        %s153 = smul.addr %s152, 4
        %s154 = scalar_lea.vmem %s0, %s153
      $region28: #{stem_forward.1} parent=23 // pred_fallthru
        _
    $region24: #{stem_forward.1} parent=5 // pred_fallthru
      _
    %p155 = scmp.le.s32.totalorder 1, %s9
    %p156 = scmp.lt.s32.totalorder %s9, 3
    %p157 = pnand %p155, %p156
    %p158 = pneg %p157
    // Predicated region
    $region29: #{stem_forward.1} parent=5 // pred_check
      _
    $region30: #{stem_forward.1} parent=5 // pred_check_branch
      %160 = sbr.rel (%p157) target = $region32
    $region31: #{stem_forward.1} parent=5 // pred_region
      %s161 = ssub.s32 %s9, 1
      %p162 = scmp.lt.s32.totalorder %s18, 1
      %s163 = scalar_select %p162, %s18, 1
      %p164 = scmp.lt.s32.totalorder %s19, 0
      %s165 = scalar_select %p164, %s19, 0
      %s166 = smul.addr %s163, 4
      %s167 = sadd.s32 %s165, %s166
      %s168 = smul.addr %s167, 4
      %s169 = scalar_lea.vmem %s0, %s168
      %p170 = pneg %p49
      %p171 = pneg %p46
      %p172 = pneg %p70
      %p173 = pneg %p67
      %p174 = pneg %p91
      %p175 = pneg %p88
      %p176 = pneg %p119
      %p177 = pneg %p116
      %p178 = scmp.lt.s32.totalorder %s18, 1
      %s179 = scalar_select %p178, %s18, 1
      %p180 = scmp.lt.s32.totalorder %s19, 0
      %s181 = scalar_select %p180, %s19, 0
      %s182 = smul.addr %s179, 4
      %s183 = sadd.s32 %s181, %s182
      %s184 = smul.addr %s183, 8
      %s185 = scalar_lea.vmem %s3, %s184
      %p186 = scmp.lt.s32.totalorder %s18, 1
      %s187 = scalar_select %p186, %s18, 1
      %p188 = scmp.lt.s32.totalorder %s19, 0
      %s189 = scalar_select %p188, %s19, 0
      %s190 = smul.addr %s187, 4
      %s191 = sadd.s32 %s189, %s190
      %s192 = smul.addr %s191, 4
      %s193 = scalar_lea.vmem %s0, %s192
      %p194 = scmp.lt.s32.totalorder %s18, 1
      %s195 = scalar_select %p194, %s18, 1
      %p196 = scmp.lt.s32.totalorder %s19, 0
      %s197 = scalar_select %p196, %s19, 0
      %s198 = smul.addr %s195, 4
      %s199 = sadd.s32 %s197, %s198
      %s200 = smul.addr %s199, 8
      %s201 = scalar_lea.vmem %s3, %s200
      %v202 = vld [vmem:[%s193] sm:$0xf]
      %v203 = vld [vmem:[%s193 + $0x4] sm:$0xf]
      %v204 = vld [vmem:[%s193 + $0x8] sm:$0xf]
      %v205 = vld [vmem:[%s193 + $0xc] sm:$0x3]
      %v206 = vunpack.c.l.bf16 %v202
      %v207 = vunpack.c.l.bf16 %v203
      %v208 = vunpack.c.l.bf16 %v204
      %v209 = vunpack.c.l.bf16 %v205
      %v210 = vld [vmem:[%s1] sm:$0xff]
      %v211 = vld [vmem:[%s1 + $0x8] sm:$0xff]
      %v212 = vld [vmem:[%s1 + $0x10] sm:$0xff]
      %v213 = vld [vmem:[%s1 + $0x18] sm:$0xff]
      %v214 = vld [vmem:[%s2] sm:$0xff]
      %v215 = vld [vmem:[%s2 + $0x8] sm:$0xff]
      %v216 = vld [vmem:[%s2 + $0x10] sm:$0xff]
      %v217 = vld [vmem:[%s2 + $0x18] sm:$0xff]
      %219 = vset.pattern.permute.xlu0 0
      %220 = vperm.xlu0 %219, %v214
      %v221 = vpop.permute.xlu0 %220
      %224 = vset.pattern.permute.xlu0 0
      %225 = vperm.xlu0 %224, %v215
      %v226 = vpop.permute.xlu0 %225
      %229 = vset.pattern.permute.xlu0 0
      %230 = vperm.xlu0 %229, %v216
      %v231 = vpop.permute.xlu0 %230
      %234 = vset.pattern.permute.xlu0 0
      %235 = vperm.xlu0 %234, %v217
      %v236 = vpop.permute.xlu0 %235
      %vm238 = vcmask 220160
      %v240 = vsel %vm238, %v210, 0
      %v243 = vsel %vm238, %v211, 0
      %v246 = vsel %vm238, %v212, 0
      %v249 = vsel %vm238, %v213, 0
      %vm251 = vcmask 1042432
      %v253 = vsel %vm251, %v209, 0
      %255 = vmatprep.subr.mxu0 0.0
      %256 = vmatpush1.msra.mxu0 %v206
      %257 = vmatprep.subr.mxu0 0.0
      %258 = vmatpush1.msra.mxu0 %v207
      %259 = vmatprep.subr.mxu0 0.0
      %260 = vmatpush1.msra.mxu0 %v208
      %261 = vmatprep.subr.mxu0 0.0
      %262 = vmatpush1.msra.mxu0 %v253
      %263 = vmatprep.subr.mxu0 0.0
      %264 = vmatpush1.msra.mxu0 0.0
      %265 = vmatprep.subr.mxu0 0.0
      %266 = vmatpush1.msra.mxu0 0.0
      %267 = vmatprep.subr.mxu0 0.0
      %268 = vmatpush1.msra.mxu0 0.0
      %269 = vmatprep.subr.mxu0 0.0
      %270 = vmatpush1.msra.mxu0 0.0
      %271 = vmatprep.subr.mxu0 0.0
      %272 = vmatpush1.msra.mxu0 0.0
      %273 = vmatprep.subr.mxu0 0.0
      %274 = vmatpush1.msra.mxu0 0.0
      %275 = vmatprep.subr.mxu0 0.0
      %276 = vmatpush1.msra.mxu0 0.0
      %277 = vmatprep.subr.mxu0 0.0
      %278 = vmatpush1.msra.mxu0 0.0
      %279 = vmatprep.subr.mxu0 0.0
      %280 = vmatpush1.msra.mxu0 0.0
      %281 = vmatprep.subr.mxu0 0.0
      %282 = vmatpush1.msra.mxu0 0.0
      %283 = vmatprep.subr.mxu0 0.0
      %284 = vmatpush1.msra.mxu0 0.0
      %285 = vmatprep.subr.mxu0 0.0
      %286 = vmatpush1.msra.mxu0 0.0
      %287 = vmatprep.subr.mxu0 0.0
      %288 = vmatpush1.msra.mxu0 0.0
      %289 = vmatprep.subr.mxu0 0.0
      %290 = vmatpush1.msra.mxu0 0.0
      %291 = vmatprep.subr.mxu0 0.0
      %292 = vmatpush1.msra.mxu0 0.0
      %293 = vmatprep.subr.mxu0 0.0
      %294 = vmatpush1.msra.mxu0 0.0
      %295 = vmatprep.subr.mxu0 0.0
      %296 = vmatpush1.msra.mxu0 0.0
      %297 = vmatprep.subr.mxu0 0.0
      %298 = vmatpush1.msra.mxu0 0.0
      %299 = vmatprep.subr.mxu0 0.0
      %300 = vmatpush1.msra.mxu0 0.0
      %301 = vmatprep.subr.mxu0 0.0
      %302 = vmatpush1.msra.mxu0 0.0
      %303 = vmatprep.subr.mxu0 0.0
      %304 = vmatpush1.msra.mxu0 0.0
      %305 = vmatprep.subr.mxu0 0.0
      %306 = vmatpush1.msra.mxu0 0.0
      %307 = vmatprep.subr.mxu0 0.0
      %308 = vmatpush1.msra.mxu0 0.0
      %309 = vmatprep.subr.mxu0 0.0
      %310 = vmatpush1.msra.mxu0 0.0
      %311 = vmatprep.subr.mxu0 0.0
      %312 = vmatpush1.msra.mxu0 0.0
      %313 = vmatprep.subr.mxu0 0.0
      %314 = vmatpush1.msra.mxu0 0.0
      %315 = vmatprep.subr.mxu0 0.0
      %316 = vmatpush1.msra.mxu0 0.0
      %317 = vmatprep.subr.mxu0 0.0
      %318 = vmatpush1.msra.mxu0 0.0
      %319 = vmatprep.mubr.f32.mxu0 0.0
      %320 = vmatmul.mubr.f32.gmra.mrb[0].mxu0 %v240
      %v321 = vpop.f32.mrb[0].mxu0
      %v322 = vadd.f32 %v221, %v321
      %v323 = vpop.f32.mrb[0].mxu0
      %324 = vmatprep.mubr.f32.mxu0 0.0
      %325 = vmatmul.mubr.f32.gmra.mrb[0].mxu0 %v243
      %v326 = vpop.f32.mrb[0].mxu0
      %v327 = vadd.f32 %v226, %v326
      %v328 = vpop.f32.mrb[0].mxu0
      %329 = vmatprep.mubr.f32.mxu0 0.0
      %330 = vmatmul.mubr.f32.gmra.mrb[0].mxu0 %v246
      %v331 = vpop.f32.mrb[0].mxu0
      %v332 = vadd.f32 %v231, %v331
      %v333 = vpop.f32.mrb[0].mxu0
      %334 = vmatprep.mubr.f32.mxu0 0.0
      %335 = vmatmul.mubr.f32.gmra.mrb[0].mxu0 %v249
      %v336 = vpop.f32.mrb[0].mxu0
      %v337 = vadd.f32 %v236, %v336
      %v338 = vpop.f32.mrb[0].mxu0
      %339 = vdwg.mxu0
      %v340 = vmax.f32 %v322, 0.0
      %v341 = vmax.f32 %v327, 0.0
      %v342 = vmax.f32 %v332, 0.0
      %v343 = vmax.f32 %v337, 0.0
      %vm344 = vcmask 523264
      %345 = vst.msk [vmem:[%s201] sm:$0xff] %vm344, %v340
      %346 = vst.msk [vmem:[%s201 + $0x8] sm:$0xff] %vm344, %v341
      %347 = vst.msk [vmem:[%s201 + $0x10] sm:$0xff] %vm344, %v342
      %348 = vst.msk [vmem:[%s201 + $0x18] sm:$0xff] %vm344, %v343
      %p349 = scmp.lt.s32.totalorder %s18, 1
      %s350 = scalar_select %p349, %s18, 1
      %p351 = scmp.lt.s32.totalorder %s19, 0
      %s352 = scalar_select %p351, %s19, 0
      %s353 = smul.addr %s350, 4
      %s354 = sadd.s32 %s352, %s353
      %s355 = smul.addr %s354, 8
      %s356 = scalar_lea.vmem %s3, %s355
      // Predicated region
      $region33: #{stem_forward.1} parent=31 // pred_check
        %p357 = pneg %p116
      $region34: #{stem_forward.1} parent=31 // pred_check_branch
        %359 = sbr.rel (%p357) target = $region36
      $region35: #{stem_forward.1} parent=31 // pred_region
        _
      $region36: #{stem_forward.1} parent=31 // pred_fallthru
        _
    $region32: #{stem_forward.1} parent=5 // pred_fallthru
      _
    %p360 = scmp.le.s32.totalorder 2, %s9
    // Predicated region
    $region37: #{stem_forward.1} parent=5 // pred_check
      %p361 = pneg %p360
    $region38: #{stem_forward.1} parent=5 // pred_check_branch
      %363 = sbr.rel (%p361) target = $region40
    $region39: #{stem_forward.1} parent=5 // pred_region
      %s364 = ssub.s32 %s9, 2
      // Predicated region
      $region41: #{stem_forward.1} parent=39 // pred_check
        %p365 = pneg %p122
      $region42: #{stem_forward.1} parent=39 // pred_check_branch
        %367 = sbr.rel (%p365) target = $region44
      $region43: #{stem_forward.1} parent=39 // pred_region
        %p368 = scmp.lt.s32.totalorder %s20, 1
        %s369 = scalar_select %p368, %s20, 1
        %p370 = scmp.lt.s32.totalorder %s21, 0
        %s371 = scalar_select %p370, %s21, 0
        %s372 = smul.addr %s369, 4
        %s373 = sadd.s32 %s371, %s372
        %s374 = smul.addr %s373, 8
        %s375 = scalar_lea.vmem %s3, %s374
      $region44: #{stem_forward.1} parent=39 // pred_fallthru
        _
    $region40: #{stem_forward.1} parent=5 // pred_fallthru
      _
  $region6: #{stem_forward.1} parent=0 // loop_footer
    %s13 = sadd.s32 1, %s9
  $region7: #{stem_forward.1} parent=0 // loop_footer_branch
    %8 = sbr.rel target = $region3
  $region8: #{stem_forward.1} parent=0 // loop_exit
    _

</llo_original>
